<compile_context>
chip_gen: v6e
topology: v6e:2x2x1
jax: 0.10.0
libtpu: 0.0.40
codegen_flags: <defaults>
</compile_context>

<pallas_src>
import functools

import jax
import jax.numpy as jnp
from jax.experimental import pallas as pl
from jax.experimental.pallas import tpu as pltpu

_LANE = 128
_SUBLANE = 8


# ----------------------------------------------------------------------------
# Device / tiling configuration
# ----------------------------------------------------------------------------
class _Cfg:
    def __init__(self, target_tile, vmem_limit, bf16_ok, want_megacore):
        self.target_tile = target_tile                  # target bytes for the x tile
        self.vmem_limit = vmem_limit                    # vmem_limit_bytes for Mosaic
        self.vmem_budget = int(vmem_limit * 0.7)        # planning budget (headroom)
        self.bf16_ok = bf16_ok                          # bf16 VALU available
        self.want_megacore = want_megacore              # 2 TensorCores per chip


def _device_config():
    kind = ""
    try:
        kind = jax.devices()[0].device_kind.lower()
    except Exception:
        pass
    if "v7" in kind:
        # 64 MiB physical VMEM per TensorCore: keep headroom; balance 2 TCs.
        return _Cfg(2 << 20, 48 * 1024 * 1024, True, True)
    if "v6" in kind:
        # 128 MiB VMEM: bigger tiles amortize per-grid-step overhead.
        return _Cfg(4 << 20, 96 * 1024 * 1024, True, False)
    if ("v5 lite" in kind) or ("v5e" in kind) or ("v5litepod" in kind):
        return _Cfg(4 << 20, 96 * 1024 * 1024, False, False)   # v5e: no bf16 VPU
    return _Cfg(2 << 20, 64 * 1024 * 1024, False, False)


def _compute_dtype(x_dtype, cfg):
    if cfg.bf16_ok and jnp.dtype(x_dtype) == jnp.dtype(jnp.bfloat16):
        return jnp.bfloat16
    return jnp.float32


def _largest_divisor_at_most(n, cap):
    cap = max(1, min(int(n), int(cap)))
    for d in range(cap, 0, -1):
        if n % d == 0:
            return d
    return 1


def _c_tile_candidates(C):
    """Channel-block candidates: 128-multiple divisors of C, or the full C."""
    if C % _LANE == 0:
        d = C // _LANE
        return [m * _LANE for m in range(1, d + 1) if d % m == 0]
    # Full-extent block bypasses the lane-divisibility rule -> no host padding.
    return [C]


def _plan_fused(B, T, C, itemsize, cfg):
    """(BB, TC) for the single-kernel norm path, or None if full T won't fit."""
    per_elem = 4 * itemsize + 4     # 2x dbuf in + 2x dbuf out (x dtype) + f32 stats temp
    cands = _c_tile_candidates(C)
    feas = [tc for tc in cands if T * tc * per_elem <= cfg.vmem_budget]
    if not feas:
        return None
    in_target = [tc for tc in feas if T * tc * itemsize <= cfg.target_tile]
    tc = max(in_target) if in_target else min(feas)
    cap = min(B,
              max(1, cfg.target_tile // max(1, T * tc * itemsize)),
              max(1, cfg.vmem_budget // max(1, T * tc * per_elem)))
    bb = _largest_divisor_at_most(B, cap)
    # Megacore balance on v7x: never hand the whole problem to one TC.
    if cfg.want_megacore and (B // bb) * (C // tc) < 2 and bb > 1:
        bb = _largest_divisor_at_most(B, max(1, bb // 2))
    return bb, tc


def _plan_3d(B, T, C, itemsize, cfg, tt_override=None):
    """(BB, TT, TC) for T-tiled kernels (split-stats and elementwise apply)."""
    per_elem = 4 * itemsize + 4
    cands = _c_tile_candidates(C)
    feas = [tc for tc in cands if _SUBLANE * tc * per_elem <= cfg.vmem_budget]
    tc = max(feas) if feas else min(cands)
    if (T * tc * itemsize <= cfg.target_tile
            and T * tc * per_elem <= cfg.vmem_budget):
        tt = T                                          # no T-tiling needed
    else:
        tt = max(1, min(cfg.target_tile // max(1, tc * itemsize),
                        cfg.vmem_budget // max(1, tc * per_elem)))
        tt = max(_SUBLANE, (tt // _SUBLANE) * _SUBLANE)
        tt = min(tt, max(_SUBLANE, (T // _SUBLANE) * _SUBLANE))
        if tt >= T:
            tt = T
    if tt_override is not None:
        tt = min(int(tt_override), T)
    cap = min(B,
              max(1, cfg.target_tile // max(1, tt * tc * itemsize)),
              max(1, cfg.vmem_budget // max(1, tt * tc * per_elem)))
    bb = _largest_divisor_at_most(B, cap)
    n_steps = (B // bb) * pl.cdiv(T, tt) * (C // tc)
    if cfg.want_megacore and n_steps < 2 and bb > 1:
        bb = _largest_divisor_at_most(B, max(1, bb // 2))
    return bb, tt, tc


# ----------------------------------------------------------------------------
# Kernels
# ----------------------------------------------------------------------------
def _norm_fused_kernel(x_ref, w_ref, b_ref, y_ref, shift_ref, stdev_ref, *,
                       eps, affine, subtract_last, compute_dtype):
    t = x_ref.shape[1]
    inv_t = 1.0 / t

    # ---- stats pass: one-pass pivoted sum / sum-sq, f32 accumulation -------
    pivot = x_ref[:, 0:1, :].astype(jnp.float32)                 # (BB, 1, TC)
    d = x_ref[...].astype(jnp.float32) - pivot                   # consumed here only
    m1 = jnp.sum(d, axis=1, keepdims=True) * inv_t               # E[x - pivot]
    m2 = jnp.sum(d * d, axis=1, keepdims=True) * inv_t           # E[(x - pivot)^2]
    mean = pivot + m1
    var = jnp.maximum(m2 - m1 * m1, 0.0)
    stdev = jnp.sqrt(var + eps)
    inv = jax.lax.rsqrt(var + eps)                               # EUP, per-channel

    shift = x_ref[:, t - 1:t, :].astype(jnp.float32) if subtract_last else mean

    if affine:
        w = w_ref[...].astype(jnp.float32)                       # (1, 1, TC)
        b = b_ref[...].astype(jnp.float32)
        scale32 = inv * w
        off32 = b - shift * scale32
    else:
        scale32 = inv
        off32 = -shift * scale32

    shift_ref[...] = shift
    stdev_ref[...] = stdev

    # ---- apply pass: re-read x (no full-tile f32 temp kept live) ----------
    scale = scale32.astype(compute_dtype)
    off = off32.astype(compute_dtype)
    y_ref[...] = (x_ref[...].astype(compute_dtype) * scale + off).astype(y_ref.dtype)


def _norm_stats_kernel(x_ref, shift_ref, stdev_ref, piv_ref, s1_ref, s2_ref, *,
                       eps, subtract_last, T, TT):
    """T-reduction stats kernel (split path): grid = (B, C, T_chunks)."""
    k = pl.program_id(2)
    n_t = pl.num_programs(2)

    @pl.when(k == 0)
    def _():
        piv_ref[...] = x_ref[:, 0:1, :].astype(jnp.float32)
        s1_ref[...] = jnp.zeros_like(s1_ref)
        s2_ref[...] = jnp.zeros_like(s2_ref)

    d = x_ref[...].astype(jnp.float32) - piv_ref[...]
    if T % TT != 0:
        # Ragged last chunk: mask rows beyond T (OOB reads are garbage).
        row = jax.lax.broadcasted_iota(jnp.int32, d.shape, 1)
        d = jnp.where(k * TT + row < T, d, 0.0)
    s1_ref[...] += jnp.sum(d, axis=1, keepdims=True)
    s2_ref[...] += jnp.sum(d * d, axis=1, keepdims=True)

    if subtract_last:
        k_last = (T - 1) // TT
        r_last = (T - 1) % TT

        @pl.when(k == k_last)
        def _():
            shift_ref[...] = x_ref[:, r_last:r_last + 1, :].astype(jnp.float32)

    @pl.when(k == n_t - 1)
    def _():
        inv_t = 1.0 / T
        m1 = s1_ref[...] * inv_t
        var = jnp.maximum(s2_ref[...] * inv_t - m1 * m1, 0.0)
        stdev_ref[...] = jnp.sqrt(var + eps)
        if not subtract_last:
            shift_ref[...] = piv_ref[...] + m1


def _apply_kernel(x_ref, scale_ref, off_ref, y_ref):
    """Fused elementwise y = x * scale + off (scale/off per (B,1,C))."""
    y_ref[...] = (x_ref[...].astype(scale_ref.dtype) * scale_ref[...]
                  + off_ref[...]).astype(y_ref.dtype)


# ----------------------------------------------------------------------------
# pallas_call wrappers
# ----------------------------------------------------------------------------
def _apply_call(x, scale, off, cfg, plan=None, tt=None):
    B, T, C = x.shape
    itemsize = jnp.dtype(x.dtype).itemsize
    if plan is None:
        plan = _plan_3d(B, T, C, itemsize, cfg, tt_override=tt)
    bb, tt_, tc = plan
    n_t = pl.cdiv(T, tt_)
    return pl.pallas_call(
        _apply_kernel,
        grid=(B // bb, n_t, C // tc),
        in_specs=[
            pl.BlockSpec((bb, tt_, tc), lambda i, t, j: (i, t, j)),
            pl.BlockSpec((bb, 1, tc), lambda i, t, j: (i, 0, j)),
            pl.BlockSpec((bb, 1, tc), lambda i, t, j: (i, 0, j)),
        ],
        out_specs=pl.BlockSpec((bb, tt_, tc), lambda i, t, j: (i, t, j)),
        out_shape=jax.ShapeDtypeStruct((B, T, C), x.dtype),
        compiler_params=pltpu.CompilerParams(
            dimension_semantics=("parallel", "parallel", "parallel"),
            vmem_limit_bytes=cfg.vmem_limit,
        ),
        cost_estimate=pl.CostEstimate(
            flops=int(2 * B * T * C),
            transcendentals=0,
            bytes_accessed=int(2 * B * T * C * itemsize + 2 * B * C * 4),
        ),
    )(x, scale, off)


def revin_norm(x, weight, bias, *, eps=1e-5, affine=True, subtract_last=False,
               force_split=False, tt=None):
    """Returns (y, shift, stdev); shift is mean (or last step), stdev as in RevIN."""
    B, T, C = x.shape
    itemsize = jnp.dtype(x.dtype).itemsize
    cfg = _device_config()
    cdt = _compute_dtype(x.dtype, cfg)
    w3 = jnp.asarray(weight, jnp.float32).reshape(1, 1, C)
    b3 = jnp.asarray(bias, jnp.float32).reshape(1, 1, C)

    plan = None if force_split else _plan_fused(B, T, C, itemsize, cfg)
    if plan is not None:
        bb, tc = plan
        kernel = functools.partial(
            _norm_fused_kernel, eps=float(eps), affine=affine,
            subtract_last=subtract_last, compute_dtype=cdt)
        y, shift, stdev = pl.pallas_call(
            kernel,
            grid=(B // bb, C // tc),
            in_specs=[
                pl.BlockSpec((bb, T, tc), lambda i, j: (i, 0, j)),
                pl.BlockSpec((1, 1, tc), lambda i, j: (0, 0, j)),
                pl.BlockSpec((1, 1, tc), lambda i, j: (0, 0, j)),
            ],
            out_specs=[
                pl.BlockSpec((bb, T, tc), lambda i, j: (i, 0, j)),
                pl.BlockSpec((bb, 1, tc), lambda i, j: (i, 0, j)),
                pl.BlockSpec((bb, 1, tc), lambda i, j: (i, 0, j)),
            ],
            out_shape=(
                jax.ShapeDtypeStruct((B, T, C), x.dtype),
                jax.ShapeDtypeStruct((B, 1, C), jnp.float32),
                jax.ShapeDtypeStruct((B, 1, C), jnp.float32),
            ),
            compiler_params=pltpu.CompilerParams(
                dimension_semantics=("parallel", "parallel"),
                vmem_limit_bytes=cfg.vmem_limit,
            ),
            cost_estimate=pl.CostEstimate(
                flops=int(8 * B * T * C),
                transcendentals=int(2 * B * C),
                bytes_accessed=int(2 * B * T * C * itemsize + 2 * B * C * 4),
            ),
        )(x, w3, b3)
        return y, shift, stdev

    # ---- split path (long T): T-reduction stats kernel + T-tiled apply -----
    bb, tt_, tc = _plan_3d(B, T, C, itemsize, cfg, tt_override=tt)
    n_t = pl.cdiv(T, tt_)
    stats_kernel = functools.partial(
        _norm_stats_kernel, eps=float(eps), subtract_last=subtract_last,
        T=T, TT=tt_)
    shift, stdev = pl.pallas_call(
        stats_kernel,
        grid=(B // bb, C // tc, n_t),
        in_specs=[pl.BlockSpec((bb, tt_, tc), lambda i, j, k: (i, k, j))],
        out_specs=[
            pl.BlockSpec((bb, 1, tc), lambda i, j, k: (i, 0, j)),
            pl.BlockSpec((bb, 1, tc), lambda i, j, k: (i, 0, j)),
        ],
        out_shape=(
            jax.ShapeDtypeStruct((B, 1, C), jnp.float32),
            jax.ShapeDtypeStruct((B, 1, C), jnp.float32),
        ),
        scratch_shapes=[
            pltpu.VMEM((bb, 1, tc), jnp.float32),   # pivot (first time step)
            pltpu.VMEM((bb, 1, tc), jnp.float32),   # sum(x - pivot)
            pltpu.VMEM((bb, 1, tc), jnp.float32),   # sum((x - pivot)^2)
        ],
        compiler_params=pltpu.CompilerParams(
            dimension_semantics=("parallel", "parallel", "arbitrary"),
            vmem_limit_bytes=cfg.vmem_limit,
        ),
        cost_estimate=pl.CostEstimate(
            flops=int(4 * B * T * C),
            transcendentals=int(B * C),
            bytes_accessed=int(B * T * C * itemsize + 2 * B * C * 4),
        ),
    )(x)

    # Per-(B,1,C) scale/offset: tiny, computed once (not per grid step).
    if affine:
        scale32 = w3 / stdev
        off32 = b3 - shift * scale32
    else:
        scale32 = 1.0 / stdev
        off32 = -shift * scale32
    scale = jnp.broadcast_to(scale32, (B, 1, C)).astype(cdt)
    off = jnp.broadcast_to(off32, (B, 1, C)).astype(cdt)
    y = _apply_call(x, scale, off, cfg, plan=(bb, tt_, tc))
    return y, shift, stdev


def revin_denorm(x, shift, stdev, weight, bias, *, eps=1e-5, affine=True, tt=None):
    B, T, C = x.shape
    cfg = _device_config()
    cdt = _compute_dtype(x.dtype, cfg)
    shift = jnp.asarray(shift, jnp.float32).reshape(B, 1, C)
    stdev = jnp.asarray(stdev, jnp.float32).reshape(B, 1, C)
    if affine:
        w3 = jnp.asarray(weight, jnp.float32).reshape(1, 1, C)
        b3 = jnp.asarray(bias, jnp.float32).reshape(1, 1, C)
        scale32 = stdev / (w3 + eps * eps)     # constant per call (not per grid step)
        off32 = shift - b3 * scale32
    else:
        scale32 = stdev
        off32 = shift
    scale = jnp.broadcast_to(scale32, (B, 1, C)).astype(cdt)
    off = jnp.broadcast_to(off32, (B, 1, C)).astype(cdt)
    return _apply_call(x, scale, off, cfg, tt=tt)


class RevINPallas:
    """Mirrors the PyTorch RevIN module (forward only, Pallas-backed)."""

    def __init__(self, num_features, eps=1e-5, affine=True, subtract_last=False):
        self.num_features = num_features
        self.eps = eps
        self.affine = affine
        self.subtract_last = subtract_last
        self.affine_weight = jnp.ones((num_features,), jnp.float32)
        self.affine_bias = jnp.zeros((num_features,), jnp.float32)
        # Buffers (mean/last folded into `shift`, exactly as used by denorm).
        self.shift = None
        self.stdev = None

    def __call__(self, x, mode):
        if mode == "norm":
            y, shift, stdev = revin_norm(
                x, self.affine_weight, self.affine_bias,
                eps=self.eps, affine=self.affine,
                subtract_last=self.subtract_last)
            self.shift, self.stdev = shift, stdev
            return y
        elif mode == "denorm":
            return revin_denorm(
                x, self.shift, self.stdev, self.affine_weight, self.affine_bias,
                eps=self.eps, affine=self.affine)
        raise NotImplementedError(f"Unsupported mode: {mode}")


# ----------------------------------------------------------------------------
# Reference (pure JAX) for verification
# ----------------------------------------------------------------------------
def _ref_norm(x, w, b, eps, subtract_last):
    mean = jnp.mean(x, axis=1, keepdims=True)
    var = jnp.var(x, axis=1, keepdims=True)
    stdev = jnp.sqrt(var + eps)
    shift = x[:, -1:, :] if subtract_last else mean
    y = (x - shift) / stdev * w + b
    return y, shift, stdev


def _ref_denorm(x, shift, stdev, w, b, eps):
    x = (x - b) / (w + eps * eps)
    return x * stdev + shift


if __name__ == "__main__":
    key = jax.random.PRNGKey(0)
    k1, k2, k3 = jax.random.split(key, 3)

    # ---------------- fused path, f32, mean shift ----------------
    B, T, C = 2, 8, 4
    x = jax.random.normal(k1, (B, T, C), dtype=jnp.float32) * 3.0 + 1.5

    revin = RevINPallas(num_features=C, eps=1e-5, affine=True, subtract_last=False)
    y = revin(x, "norm")
    x_rec = revin(y, "denorm")
    jax.block_until_ready(x_rec)

    y_ref, sh_ref, st_ref = _ref_norm(x, revin.affine_weight, revin.affine_bias,
                                      revin.eps, False)
    x_rec_ref = _ref_denorm(y_ref, sh_ref, st_ref, revin.affine_weight,
                            revin.affine_bias, revin.eps)
    assert jnp.allclose(y, y_ref, atol=1e-4, rtol=1e-4)
    assert jnp.allclose(revin.shift, sh_ref, atol=1e-4, rtol=1e-4)
    assert jnp.allclose(revin.stdev, st_ref, atol=1e-4, rtol=1e-4)
    assert jnp.allclose(x_rec, x_rec_ref, atol=1e-4, rtol=1e-4)
    assert jnp.allclose(x_rec, x, atol=1e-3, rtol=1e-3)

    # ---------------- fused path, f32, subtract_last ----------------
    revin2 = RevINPallas(num_features=C, eps=1e-5, affine=True, subtract_last=True)
    y2 = revin2(x, "norm")
    x2_rec = revin2(y2, "denorm")
    jax.block_until_ready(x2_rec)
    y2_ref, sh2_ref, st2_ref = _ref_norm(x, revin2.affine_weight,
                                         revin2.affine_bias, revin2.eps, True)
    assert jnp.allclose(y2, y2_ref, atol=1e-4, rtol=1e-4)
    assert jnp.allclose(revin2.shift, sh2_ref, atol=1e-4, rtol=1e-4)
    assert jnp.allclose(revin2.stdev, st2_ref, atol=1e-4, rtol=1e-4)
    assert jnp.allclose(x2_rec, x, atol=1e-3, rtol=1e-3)

    # ---------------- split path (T-tiled stats + apply), ragged T ----------
    Bs, Ts, Cs = 4, 40, 4
    xs = jax.random.normal(k2, (Bs, Ts, Cs), dtype=jnp.float32) * 2.0 - 0.7
    w = jnp.ones((Cs,), jnp.float32)
    b = jnp.zeros((Cs,), jnp.float32)
    for sub_last in (False, True):
        ys, shs, sts = revin_norm(xs, w, b, eps=1e-5, affine=True,
                                  subtract_last=sub_last, force_split=True, tt=16)
        xs_rec = revin_denorm(ys, shs, sts, w, b, eps=1e-5, affine=True, tt=16)
        jax.block_until_ready(xs_rec)
        ys_ref, shs_ref, sts_ref = _ref_norm(xs, w, b, 1e-5, sub_last)
        assert jnp.allclose(ys, ys_ref, atol=1e-4, rtol=1e-4)
        assert jnp.allclose(shs, shs_ref, atol=1e-4, rtol=1e-4)
        assert jnp.allclose(sts, sts_ref, atol=1e-4, rtol=1e-4)
        assert jnp.allclose(xs_rec, xs, atol=1e-3, rtol=1e-3)

    # ---------------- bf16 input (bf16 apply pass on v6e/v7x) ----------------
    Bb, Tb, Cb = 2, 16, 256
    xb = (jax.random.normal(k3, (Bb, Tb, Cb), dtype=jnp.float32) * 2.0
          + 0.5).astype(jnp.bfloat16)
    revb = RevINPallas(num_features=Cb, eps=1e-5, affine=True, subtract_last=False)
    yb = revb(xb, "norm")
    xb_rec = revb(yb, "denorm")
    jax.block_until_ready(xb_rec)
    yb_ref, shb_ref, stb_ref = _ref_norm(xb.astype(jnp.float32), revb.affine_weight,
                                         revb.affine_bias, revb.eps, False)
    assert jnp.allclose(yb.astype(jnp.float32), yb_ref, atol=5e-2, rtol=5e-2)
    assert jnp.allclose(revb.shift, shb_ref, atol=1e-3, rtol=1e-3)
    assert jnp.allclose(revb.stdev, stb_ref, atol=1e-3, rtol=1e-3)
    assert jnp.allclose(xb_rec.astype(jnp.float32), xb.astype(jnp.float32),
                        atol=2e-1, rtol=5e-2)

    print("KERNEL_OK")
</pallas_src>

<mosaic_0001>
module attributes {stable_mosaic.version = 11 : i64} {
  func.func @_norm_fused_kernel(%arg0: i32, %arg1: i32, %arg2: memref<2x8x4xf32, #tpu.memory_space<vmem>>, %arg3: memref<1x1x4xf32, #tpu.memory_space<vmem>>, %arg4: memref<1x1x4xf32, #tpu.memory_space<vmem>>, %arg5: memref<2x8x4xf32, #tpu.memory_space<vmem>>, %arg6: memref<2x1x4xf32, #tpu.memory_space<vmem>>, %arg7: memref<2x1x4xf32, #tpu.memory_space<vmem>>) attributes {dimension_semantics = [#tpu.dimension_semantics<parallel>, #tpu.dimension_semantics<parallel>], iteration_bounds = array<i64: 1, 1>, scalar_prefetch = 0 : i64, scratch_operands = 0 : i64, tpu.core_type = #tpu.core_type<tc>, window_params = [{transform_indices = @transform_0, window_bounds = array<i64: 2, 8, 4>}, {transform_indices = @transform_1, window_bounds = array<i64: 1, 1, 4>}, {transform_indices = @transform_2, window_bounds = array<i64: 1, 1, 4>}, {transform_indices = @transform_3, window_bounds = array<i64: 2, 8, 4>}, {transform_indices = @transform_4, window_bounds = array<i64: 2, 1, 4>}, {transform_indices = @transform_5, window_bounds = array<i64: 2, 1, 4>}]} {
    %c0 = arith.constant 0 : index
    %c0_0 = arith.constant 0 : index
    %c0_1 = arith.constant 0 : index
    %0 = vector.load %arg2[%c0, %c0_0, %c0_1] : memref<2x8x4xf32, #tpu.memory_space<vmem>>, vector<2x1x4xf32>
    %c0_2 = arith.constant 0 : index
    %c0_3 = arith.constant 0 : index
    %c0_4 = arith.constant 0 : index
    %1 = vector.load %arg2[%c0_2, %c0_3, %c0_4] : memref<2x8x4xf32, #tpu.memory_space<vmem>>, vector<2x8x4xf32>
    %2 = vector.broadcast %0 : vector<2x1x4xf32> to vector<2x8x4xf32>
    %3 = arith.subf %1, %2 : vector<2x8x4xf32>
    %cst = arith.constant dense<0.000000e+00> : vector<2x4xf32>
    %4 = vector.multi_reduction <add>, %3, %cst [1] : vector<2x8x4xf32> to vector<2x4xf32>
    %5 = vector.shape_cast %4 : vector<2x4xf32> to vector<2x1x4xf32>
    %cst_5 = arith.constant 1.250000e-01 : f32
    %6 = vector.broadcast %cst_5 : f32 to vector<2x1x4xf32>
    %7 = arith.mulf %5, %6 : vector<2x1x4xf32>
    %8 = arith.mulf %3, %3 : vector<2x8x4xf32>
    %cst_6 = arith.constant dense<0.000000e+00> : vector<2x4xf32>
    %9 = vector.multi_reduction <add>, %8, %cst_6 [1] : vector<2x8x4xf32> to vector<2x4xf32>
    %10 = vector.shape_cast %9 : vector<2x4xf32> to vector<2x1x4xf32>
    %cst_7 = arith.constant 1.250000e-01 : f32
    %11 = vector.broadcast %cst_7 : f32 to vector<2x1x4xf32>
    %12 = arith.mulf %10, %11 : vector<2x1x4xf32>
    %13 = arith.addf %0, %7 : vector<2x1x4xf32>
    %14 = arith.mulf %7, %7 : vector<2x1x4xf32>
    %15 = arith.subf %12, %14 : vector<2x1x4xf32>
    %cst_8 = arith.constant 0.000000e+00 : f32
    %16 = vector.broadcast %cst_8 : f32 to vector<2x1x4xf32>
    %17 = arith.maximumf %15, %16 : vector<2x1x4xf32>
    %cst_9 = arith.constant 9.99999974E-6 : f32
    %18 = vector.broadcast %cst_9 : f32 to vector<2x1x4xf32>
    %19 = arith.addf %17, %18 : vector<2x1x4xf32>
    %20 = math.sqrt %19 : vector<2x1x4xf32>
    %cst_10 = arith.constant 9.99999974E-6 : f32
    %21 = vector.broadcast %cst_10 : f32 to vector<2x1x4xf32>
    %22 = arith.addf %17, %21 : vector<2x1x4xf32>
    %23 = math.rsqrt %22 : vector<2x1x4xf32>
    %c0_11 = arith.constant 0 : index
    %c0_12 = arith.constant 0 : index
    %c0_13 = arith.constant 0 : index
    %24 = vector.load %arg3[%c0_11, %c0_12, %c0_13] : memref<1x1x4xf32, #tpu.memory_space<vmem>>, vector<1x1x4xf32>
    %c0_14 = arith.constant 0 : index
    %c0_15 = arith.constant 0 : index
    %c0_16 = arith.constant 0 : index
    %25 = vector.load %arg4[%c0_14, %c0_15, %c0_16] : memref<1x1x4xf32, #tpu.memory_space<vmem>>, vector<1x1x4xf32>
    %26 = vector.broadcast %24 : vector<1x1x4xf32> to vector<2x1x4xf32>
    %27 = arith.mulf %23, %26 : vector<2x1x4xf32>
    %28 = arith.mulf %13, %27 : vector<2x1x4xf32>
    %29 = vector.broadcast %25 : vector<1x1x4xf32> to vector<2x1x4xf32>
    %30 = arith.subf %29, %28 : vector<2x1x4xf32>
    %c0_17 = arith.constant 0 : index
    %c0_18 = arith.constant 0 : index
    %c0_19 = arith.constant 0 : index
    %31 = vector.load %arg6[%c0_17, %c0_18, %c0_19] : memref<2x1x4xf32, #tpu.memory_space<vmem>>, vector<2x1x4xf32>
    tpu.vector_store %arg6[%c0_17, %c0_18, %c0_19], %13 {strides = array<i32>} : memref<2x1x4xf32, #tpu.memory_space<vmem>>, vector<2x1x4xf32>,
    %c0_20 = arith.constant 0 : index
    %c0_21 = arith.constant 0 : index
    %c0_22 = arith.constant 0 : index
    %32 = vector.load %arg7[%c0_20, %c0_21, %c0_22] : memref<2x1x4xf32, #tpu.memory_space<vmem>>, vector<2x1x4xf32>
    tpu.vector_store %arg7[%c0_20, %c0_21, %c0_22], %20 {strides = array<i32>} : memref<2x1x4xf32, #tpu.memory_space<vmem>>, vector<2x1x4xf32>,
    %c0_23 = arith.constant 0 : index
    %c0_24 = arith.constant 0 : index
    %c0_25 = arith.constant 0 : index
    %33 = vector.load %arg2[%c0_23, %c0_24, %c0_25] : memref<2x8x4xf32, #tpu.memory_space<vmem>>, vector<2x8x4xf32>
    %34 = vector.broadcast %27 : vector<2x1x4xf32> to vector<2x8x4xf32>
    %35 = arith.mulf %33, %34 : vector<2x8x4xf32>
    %36 = vector.broadcast %30 : vector<2x1x4xf32> to vector<2x8x4xf32>
    %37 = arith.addf %35, %36 : vector<2x8x4xf32>
    %c0_26 = arith.constant 0 : index
    %c0_27 = arith.constant 0 : index
    %c0_28 = arith.constant 0 : index
    %38 = vector.load %arg5[%c0_26, %c0_27, %c0_28] : memref<2x8x4xf32, #tpu.memory_space<vmem>>, vector<2x8x4xf32>
    tpu.vector_store %arg5[%c0_26, %c0_27, %c0_28], %37 {strides = array<i32>} : memref<2x8x4xf32, #tpu.memory_space<vmem>>, vector<2x8x4xf32>,
    return
  }
  func.func @transform_0(%arg0: i32, %arg1: i32) -> (i32, i32, i32) {
    %c0_i32 = arith.constant 0 : i32
    %c0_i32_0 = arith.constant 0 : i32
    return %arg0, %c0_i32, %arg1 : i32, i32, i32
  }
  func.func @transform_1(%arg0: i32, %arg1: i32) -> (i32, i32, i32) {
    %c0_i32 = arith.constant 0 : i32
    %c0_i32_0 = arith.constant 0 : i32
    %c0_i32_1 = arith.constant 0 : i32
    return %c0_i32, %c0_i32_0, %arg1 : i32, i32, i32
  }
  func.func @transform_2(%arg0: i32, %arg1: i32) -> (i32, i32, i32) {
    %c0_i32 = arith.constant 0 : i32
    %c0_i32_0 = arith.constant 0 : i32
    %c0_i32_1 = arith.constant 0 : i32
    return %c0_i32, %c0_i32_0, %arg1 : i32, i32, i32
  }
  func.func @transform_3(%arg0: i32, %arg1: i32) -> (i32, i32, i32) {
    %c0_i32 = arith.constant 0 : i32
    %c0_i32_0 = arith.constant 0 : i32
    return %arg0, %c0_i32, %arg1 : i32, i32, i32
  }
  func.func @transform_4(%arg0: i32, %arg1: i32) -> (i32, i32, i32) {
    %c0_i32 = arith.constant 0 : i32
    %c0_i32_0 = arith.constant 0 : i32
    return %arg0, %c0_i32, %arg1 : i32, i32, i32
  }
  func.func @transform_5(%arg0: i32, %arg1: i32) -> (i32, i32, i32) {
    %c0_i32 = arith.constant 0 : i32
    %c0_i32_0 = arith.constant 0 : i32
    return %arg0, %c0_i32, %arg1 : i32, i32, i32
  }
}

</mosaic_0001>

<llo_original>
// kernel: tpu_custom_call.1
$region0: #{tpu_custom_call.1}
  #allocation0 [shape = 'u32[]', space=smem, size = 0x4, offset = 0x4, fixed_abs, tag = 'smem constant byte address 0x4 - core index']
  #allocation1 [shape = 'u32[144,128]{1,0:T(1,128)}', space=vmem, size = 0x12000, scoped, tag = 'internal scratch']
  %s0 = inlined_call_operand.vmem [shape: f32[2,8,4], index: 0, kind: input, shape index: {}]
  %s1 = inlined_call_operand.vmem [shape: f32[1,1,4], index: 1, kind: input, shape index: {}]
  %s2 = inlined_call_operand.vmem [shape: f32[1,1,4], index: 2, kind: input, shape index: {}]
  %s3 = inlined_call_operand.vmem [shape: f32[2,8,4], index: 3, kind: output, shape index: {0}]
  %s4 = inlined_call_operand.hbm [shape: f32[2,1,4], index: 4, kind: output, shape index: {1}]
  %s5 = inlined_call_operand.hbm [shape: f32[2,1,4], index: 5, kind: output, shape index: {2}]
  %6 = xla_tuple %s3, %s4, %s5
  %s7 = sld [smem:[#allocation0]]
  $region38: #{tpu_custom_call.1} parent=0
    _
  %s9 = ssub.s32 1, %s7
  %s10 = scalar_select 0, %s9, %s7
  $region1: #{tpu_custom_call.1} parent=0
    #allocation2 [shape = 'u8[1024]{0}', space=vmem, size = 0x400, scoped, tag = 'output window, operand 1, single buffered']
    #allocation3 [shape = 's32[1]{0}', space=sflag, size = 0x4, scoped, tag = 'scoped memory for tpu_custom_call.1']
    #allocation4 [shape = 'u8[1024]{0}', space=vmem, size = 0x400, scoped, tag = 'output window, operand 2, single buffered']
    #allocation5 [shape = 's32[1]{0}', space=sflag, size = 0x4, scoped, tag = 'scoped memory for tpu_custom_call.1']
    %11 = vsyncpa [#allocation3], 0
    %12 = vsyncpa [#allocation5], 0
    // Predicated region
    $region2: #{tpu_custom_call.1} parent=1 // pred_check
      _
    $region3: #{tpu_custom_call.1} parent=1 // pred_check_branch
      %14 = sbr.rel (0) target = $region5
    $region4: #{tpu_custom_call.1} parent=1 // pred_region
      _
    $region5: #{tpu_custom_call.1} parent=1 // pred_fallthru
      _
    // Predicated region
    $region6: #{tpu_custom_call.1} parent=1 // pred_check
      _
    $region7: #{tpu_custom_call.1} parent=1 // pred_check_branch
      %16 = sbr.rel (0) target = $region9
    $region8: #{tpu_custom_call.1} parent=1 // pred_region
      _
    $region9: #{tpu_custom_call.1} parent=1 // pred_fallthru
      _
    // Predicated region
    $region10: #{tpu_custom_call.1} parent=1 // pred_check
      _
    $region11: #{tpu_custom_call.1} parent=1 // pred_check_branch
      %18 = sbr.rel (0) target = $region13
    $region12: #{tpu_custom_call.1} parent=1 // pred_region
      _
    $region13: #{tpu_custom_call.1} parent=1 // pred_fallthru
      _
    %v19 = vld [vmem:[%s0] sm:$0x1]
    %v20 = vld [vmem:[%s0 + $0x8] sm:$0x1]
    %v21 = vld [vmem:[%s0] sm:$0xff]
    %v22 = vld [vmem:[%s0 + $0x8] sm:$0xff]
    %v23 = vlaneseq
    %v24 = vshrl.u32 %v23, 7
    %v25 = vsub.s32 0, %v24
    %v26 = vrot.slane %v19, %v25
    %v27 = vlaneseq
    %v28 = vshrl.u32 %v27, 7
    %v29 = vsub.s32 0, %v28
    %v30 = vrot.slane %v20, %v29
    %v31 = vsub.f32 %v21, %v26
    %v32 = vsub.f32 %v22, %v30
    %vm33 = vcmask 31744
    %v34 = vsel %vm33, %v31, 0.0
    %v35 = vrot.slane %v34, 4
    %v36 = vadd.f32 %v34, %v35
    %v37 = vrot.slane %v36, 2
    %v38 = vadd.f32 %v36, %v37
    %v39 = vrot.slane %v38, 1
    %v40 = vadd.f32 %v38, %v39
    %v41 = vsel %vm33, %v32, 0.0
    %v42 = vrot.slane %v41, 4
    %v43 = vadd.f32 %v41, %v42
    %v44 = vrot.slane %v43, 2
    %v45 = vadd.f32 %v43, %v44
    %v46 = vrot.slane %v45, 1
    %v47 = vadd.f32 %v45, %v46
    %v48 = vmul.f32 %v40, 0.125
    %v49 = vmul.f32 %v47, 0.125
    %v50 = vmul.f32 %v31, %v31
    %v51 = vmul.f32 %v32, %v32
    %v52 = vsel %vm33, %v50, 0.0
    %v53 = vrot.slane %v52, 4
    %v54 = vadd.f32 %v52, %v53
    %v55 = vrot.slane %v54, 2
    %v56 = vadd.f32 %v54, %v55
    %v57 = vrot.slane %v56, 1
    %v58 = vadd.f32 %v56, %v57
    %v59 = vsel %vm33, %v51, 0.0
    %v60 = vrot.slane %v59, 4
    %v61 = vadd.f32 %v59, %v60
    %v62 = vrot.slane %v61, 2
    %v63 = vadd.f32 %v61, %v62
    %v64 = vrot.slane %v63, 1
    %v65 = vadd.f32 %v63, %v64
    %v66 = vmul.f32 %v58, 0.125
    %v67 = vmul.f32 %v65, 0.125
    %v68 = vadd.f32 %v19, %v48
    %v69 = vadd.f32 %v20, %v49
    %v70 = vmul.f32 %v48, %v48
    %v71 = vmul.f32 %v49, %v49
    %v72 = vsub.f32 %v66, %v70
    %v73 = vsub.f32 %v67, %v71
    %v74 = vmax.f32 %v72, 0.0
    %v75 = vmax.f32 %v73, 0.0
    %v76 = vadd.f32 %v74, 1e-05
    %v77 = vadd.f32 %v75, 1e-05
    %v78 = vrsqrt.pop %v76
    %v79 = vmul.f32 %v76, %v78
    %vm80 = vcmp.eq.f32.partialorder %v76, inf
    %v81 = vsel %vm80, %v76, %v79
    %vm82 = vcmp.eq.f32.partialorder %v76, 0.0
    %v83 = vand.u32 %v76, 2147483648
    %v84 = vsel %vm82, %v83, %v81
    %v85 = vrsqrt.pop %v77
    %v86 = vmul.f32 %v77, %v85
    %vm87 = vcmp.eq.f32.partialorder %v77, inf
    %v88 = vsel %vm87, %v77, %v86
    %vm89 = vcmp.eq.f32.partialorder %v77, 0.0
    %v90 = vand.u32 %v77, 2147483648
    %v91 = vsel %vm89, %v90, %v88
    %v92 = vrsqrt.pop %v76
    %v93 = vrsqrt.pop %v77
    %v94 = vld [vmem:[%s1] sm:$0x1]
    %v95 = vld [vmem:[%s2] sm:$0x1]
    %v96 = vmul.f32 %v92, %v94
    %v97 = vmul.f32 %v93, %v94
    %v98 = vmul.f32 %v68, %v96
    %v99 = vmul.f32 %v69, %v97
    %v100 = vsub.f32 %v95, %v98
    %v101 = vsub.f32 %v95, %v99
    %vm102 = vcmask 24576
    %103 = vst.msk [vmem:[#allocation2] sm:$0x1] %vm102, %v68
    %104 = vst.msk [vmem:[#allocation2 + $0x1] sm:$0x1] %vm102, %v69
    %105 = vst.msk [vmem:[#allocation4] sm:$0x1] %vm102, %v84
    %106 = vst.msk [vmem:[#allocation4 + $0x1] sm:$0x1] %vm102, %v91
    %v107 = vld [vmem:[%s0] sm:$0xff]
    %v108 = vld [vmem:[%s0 + $0x8] sm:$0xff]
    %v109 = vlaneseq
    %v110 = vshrl.u32 %v109, 7
    %v111 = vsub.s32 0, %v110
    %v112 = vrot.slane %v96, %v111
    %v113 = vlaneseq
    %v114 = vshrl.u32 %v113, 7
    %v115 = vsub.s32 0, %v114
    %v116 = vrot.slane %v97, %v115
    %v117 = vmul.f32 %v107, %v112
    %v118 = vmul.f32 %v108, %v116
    %v121 = vlaneseq
    %v122 = vshrl.u32 %v121, 7
    %v123 = vsub.s32 0, %v122
    %v124 = vrot.slane %v100, %v123
    %v125 = vlaneseq
    %v126 = vshrl.u32 %v125, 7
    %v127 = vsub.s32 0, %v126
    %v128 = vrot.slane %v101, %v127
    %v131 = vadd.f32 %v117, %v124
    %v132 = vadd.f32 %v118, %v128
    %133 = vst.msk [vmem:[%s3] sm:$0xff] %vm33, %v131
    %134 = vst.msk [vmem:[%s3 + $0x8] sm:$0xff] %vm33, %v132
    // Predicated region
    $region14: #{tpu_custom_call.1} parent=1 // pred_check
      _
    $region15: #{tpu_custom_call.1} parent=1 // pred_check_branch
      %136 = sbr.rel (0) target = $region17
    $region16: #{tpu_custom_call.1} parent=1 // pred_region
      _
    $region17: #{tpu_custom_call.1} parent=1 // pred_fallthru
      _
    // Predicated region
    $region18: #{tpu_custom_call.1} parent=1 // pred_check
      _
    $region19: #{tpu_custom_call.1} parent=1 // pred_check_branch
      %138 = sbr.rel (0) target = $region21
    $region20: #{tpu_custom_call.1} parent=1 // pred_region
      %s140 = ssub.s32 32, 32
      %141 = vsyncadd [#allocation3], %s140
      %s142 = sshll.u32 [#allocation2], 4
      %s143 = int_to_ptr.vmem [resolvable:$true] %s142
      %148 = dma.vmem_to_hbm [thread:$0]  %s143, 32, %s4, [#allocation3], 16, 16, 1
    $region21: #{tpu_custom_call.1} parent=1 // pred_fallthru
      _
    // Predicated region
    $region22: #{tpu_custom_call.1} parent=1 // pred_check
      _
    $region23: #{tpu_custom_call.1} parent=1 // pred_check_branch
      %150 = sbr.rel (0) target = $region25
    $region24: #{tpu_custom_call.1} parent=1 // pred_region
      %s152 = ssub.s32 32, 32
      %153 = vsyncadd [#allocation5], %s152
      %s154 = sshll.u32 [#allocation4], 4
      %s155 = int_to_ptr.vmem [resolvable:$true] %s154
      %160 = dma.vmem_to_hbm [thread:$0]  %s155, 32, %s5, [#allocation5], 16, 16, 1
    $region25: #{tpu_custom_call.1} parent=1 // pred_fallthru
      _
    // Predicated region
    $region26: #{tpu_custom_call.1} parent=1 // pred_check
      _
    $region27: #{tpu_custom_call.1} parent=1 // pred_check_branch
      %162 = sbr.rel (0) target = $region29
    $region28: #{tpu_custom_call.1} parent=1 // pred_region
      _
    $region29: #{tpu_custom_call.1} parent=1 // pred_fallthru
      _
    // Predicated region
    $region30: #{tpu_custom_call.1} parent=1 // pred_check
      _
    $region31: #{tpu_custom_call.1} parent=1 // pred_check_branch
      %164 = sbr.rel (0) target = $region33
    $region32: #{tpu_custom_call.1} parent=1 // pred_region
      %165 = dma.done [#allocation3], 32
    $region33: #{tpu_custom_call.1} parent=1 // pred_fallthru
      _
    // Predicated region
    $region34: #{tpu_custom_call.1} parent=1 // pred_check
      _
    $region35: #{tpu_custom_call.1} parent=1 // pred_check_branch
      %167 = sbr.rel (0) target = $region37
    $region36: #{tpu_custom_call.1} parent=1 // pred_region
      %168 = dma.done [#allocation5], 32
    $region37: #{tpu_custom_call.1} parent=1 // pred_fallthru
      _
    %169 = vsyncpa [#allocation3], 1
    %170 = vsyncpa [#allocation5], 1

</llo_original>
